<compile_context>
chip_gen: v5e
topology: v5e:2x2
jax: 0.10.0
libtpu: 0.0.40
codegen_flags: <defaults>
</compile_context>

<pallas_src>
import jax
import jax.numpy as jnp
from jax import lax
from jax.experimental import pallas as pl
from jax.experimental.pallas import tpu as pltpu


def audio_encoder_kernel(x_ref, wa_ref, wb_ref, o_ref):
    # x_ref block : (1, half, M)  -- half = L//2 samples on sublanes, M half-
    #                                frames on lanes, one batch item.
    # wa/wb       : (N, half) bf16 -- first / second half of the conv taps.
    # o_ref block : (1, N, K) f32  -- K = M - 1 output frames.
    xb = x_ref[0].astype(jnp.bfloat16)                       # (half, M)

    # Two native-rate bf16 MXU matmuls with f32 accumulation.
    ya = jnp.dot(wa_ref[...], xb,
                 preferred_element_type=jnp.float32)         # (N, M)
    yb = jnp.dot(wb_ref[...], xb,
                 preferred_element_type=jnp.float32)         # (N, M)

    # out[n, k] = ya[n, k] + yb[n, k + 1]   (frame k spans half-blocks k, k+1)
    M = ya.shape[1]
    K = o_ref.shape[2]
    yb_next = pltpu.roll(yb, shift=M - 1, axis=1)            # [:, k] <- yb[:, k+1]
    y = jnp.maximum(ya + yb_next, 0.0)                       # ReLU (VPU)
    o_ref[0] = y[:, :K]


def audio_encoder(x, weight, L):
    """relu(Conv1d(1, N, kernel_size=L, stride=L//2, bias=False)(x[:, None]))

    x      : (B, T)  float32 audio samples
    weight : (N, L)  conv1d_U weight with the singleton in-channel squeezed
    returns: (B, N, K) float32, K = (T_trunc - L)//(L//2) + 1
    """
    assert L % 2 == 0, "audioEncoder uses stride = L // 2"
    stride = L // 2
    B, T = x.shape
    N = weight.shape[0]

    M = T // stride
    assert M >= 2, "signal too short for a single frame"
    K = M - 1
    # Tail samples that cannot form a full frame are dropped (same as PyTorch).
    x = x[:, : M * stride]

    # Wrapper-side layout plumbing: (B, T) -> (B, half, M).
    x_t = jnp.transpose(x.reshape(B, M, stride), (0, 2, 1))

    # Split taps into the two half-frame contributions; bf16 for the MXU.
    w_a = weight[:, :stride].astype(jnp.bfloat16)            # (N, half)
    w_b = weight[:, stride:].astype(jnp.bfloat16)            # (N, half)

    grid_spec = pltpu.PrefetchScalarGridSpec(
        num_scalar_prefetch=0,
        grid=(B,),
        in_specs=[
            pl.BlockSpec((1, stride, M), lambda b: (b, 0, 0)),   # signal
            pl.BlockSpec((N, stride), lambda b: (0, 0)),         # taps (first half)
            pl.BlockSpec((N, stride), lambda b: (0, 0)),         # taps (second half)
        ],
        out_specs=pl.BlockSpec((1, N, K), lambda b: (b, 0, 0)),
    )
    return pl.pallas_call(
        audio_encoder_kernel,
        out_shape=jax.ShapeDtypeStruct((B, N, K), jnp.float32),
        grid_spec=grid_spec,
        compiler_params=pltpu.CompilerParams(
            dimension_semantics=("parallel",)),   # batch across TCs on v7x
    )(x_t, w_a, w_b)


def reference(x, weight, L):
    """Pure-JAX f32 reference of the PyTorch forward."""
    stride = L // 2
    B, T = x.shape
    K = (T - L) // stride + 1
    idx = jnp.arange(K)[:, None] * stride + jnp.arange(L)[None, :]
    frames = x[:, idx]                                       # (B, K, L)
    out = jnp.einsum("bkl,nl->bnk", frames, weight,
                     precision=lax.Precision.HIGHEST)
    return jnp.maximum(out, 0.0)


if __name__ == "__main__":
    # Small but lane-dense shapes: L=16 (stride 8), N=32 filters, and an audio
    # length giving K=256 output frames so the time axis fills 256 lanes.
    B, L, N = 2, 16, 32
    K_frames = 256
    stride = L // 2
    T = (K_frames + 1) * stride          # 2056 samples per batch item

    key = jax.random.PRNGKey(0)
    kx, kw = jax.random.split(key)
    x = jax.random.normal(kx, (B, T), dtype=jnp.float32)
    weight = jax.random.normal(kw, (N, L), dtype=jnp.float32) / jnp.sqrt(L)

    out = audio_encoder(x, weight, L)
    out = jax.block_until_ready(out)

    ref = reference(x, weight, L)
    assert out.shape == ref.shape == (B, N, K_frames)
    # bf16 MXU operands (per perf review) -> slightly relaxed tolerance.
    max_err = float(jnp.max(jnp.abs(out - ref)))
    assert jnp.allclose(out, ref, atol=5e-2, rtol=5e-2), max_err

    print("KERNEL_OK")
</pallas_src>

<mosaic_0001>
module attributes {stable_mosaic.version = 11 : i64} {
  func.func @audio_encoder_kernel(%arg0: i32, %arg1: memref<1x8x257xf32, #tpu.memory_space<vmem>>, %arg2: memref<32x8xbf16, #tpu.memory_space<vmem>>, %arg3: memref<32x8xbf16, #tpu.memory_space<vmem>>, %arg4: memref<1x32x256xf32, #tpu.memory_space<vmem>>) attributes {dimension_semantics = [#tpu.dimension_semantics<parallel>], iteration_bounds = array<i64: 2>, scalar_prefetch = 0 : i64, scratch_operands = 0 : i64, tpu.core_type = #tpu.core_type<tc>, window_params = [{transform_indices = @transform_0, window_bounds = array<i64: 1, 8, 257>}, {pipeline_mode = #tpu.pipeline_mode<synchronous>, transform_indices = @transform_1, window_bounds = array<i64: 32, 8>}, {pipeline_mode = #tpu.pipeline_mode<synchronous>, transform_indices = @transform_2, window_bounds = array<i64: 32, 8>}, {transform_indices = @transform_3, window_bounds = array<i64: 1, 32, 256>}]} {
    %c0 = arith.constant 0 : index
    %c0_0 = arith.constant 0 : index
    %c0_1 = arith.constant 0 : index
    %0 = vector.load %arg1[%c0, %c0_0, %c0_1] : memref<1x8x257xf32, #tpu.memory_space<vmem>>, vector<1x8x257xf32>
    %1 = vector.shape_cast %0 : vector<1x8x257xf32> to vector<8x257xf32>
    %2 = arith.truncf %1 : vector<8x257xf32> to vector<8x257xbf16>
    %c0_2 = arith.constant 0 : index
    %c0_3 = arith.constant 0 : index
    %3 = vector.load %arg2[%c0_2, %c0_3] : memref<32x8xbf16, #tpu.memory_space<vmem>>, vector<32x8xbf16>
    %cst = arith.constant dense<0.000000e+00> : vector<32x257xf32>
    %4 = tpu.matmul %3, %2, %cst {dimension_numbers = #tpu.dot_dimension_numbers<[1], [0], [0], [1], [0, 0, 1, 1], [], []>} : vector<32x8xbf16>, vector<8x257xbf16>, vector<32x257xf32> -> vector<32x257xf32>
    %c0_4 = arith.constant 0 : index
    %c0_5 = arith.constant 0 : index
    %5 = vector.load %arg3[%c0_4, %c0_5] : memref<32x8xbf16, #tpu.memory_space<vmem>>, vector<32x8xbf16>
    %cst_6 = arith.constant dense<0.000000e+00> : vector<32x257xf32>
    %6 = tpu.matmul %5, %2, %cst_6 {dimension_numbers = #tpu.dot_dimension_numbers<[1], [0], [0], [1], [0, 0, 1, 1], [], []>} : vector<32x8xbf16>, vector<8x257xbf16>, vector<32x257xf32> -> vector<32x257xf32>
    %c256_i32 = arith.constant 256 : i32
    %7 = tpu.dynamic_rotate %6 by %c256_i32 dim 1 : vector<32x257xf32>, i32 -> vector<32x257xf32>
    %8 = arith.addf %4, %7 : vector<32x257xf32>
    %cst_7 = arith.constant 0.000000e+00 : f32
    %9 = vector.broadcast %cst_7 : f32 to vector<32x257xf32>
    %10 = arith.maximumf %8, %9 : vector<32x257xf32>
    %11 = vector.extract_strided_slice %10 {offsets = [0, 0], sizes = [32, 256], strides = [1, 1]} : vector<32x257xf32> to vector<32x256xf32>
    %c0_8 = arith.constant 0 : index
    %c0_9 = arith.constant 0 : index
    %c0_10 = arith.constant 0 : index
    %12 = vector.load %arg4[%c0_8, %c0_9, %c0_10] : memref<1x32x256xf32, #tpu.memory_space<vmem>>, vector<1x32x256xf32>
    %13 = vector.shape_cast %12 : vector<1x32x256xf32> to vector<32x256xf32>
    %14 = vector.shape_cast %11 : vector<32x256xf32> to vector<1x32x256xf32>
    tpu.vector_store %arg4[%c0_8, %c0_9, %c0_10], %14 {strides = array<i32>} : memref<1x32x256xf32, #tpu.memory_space<vmem>>, vector<1x32x256xf32>,
    return
  }
  func.func @transform_0(%arg0: i32) -> (i32, i32, i32) {
    %c0_i32 = arith.constant 0 : i32
    %c0_i32_0 = arith.constant 0 : i32
    %c0_i32_1 = arith.constant 0 : i32
    return %arg0, %c0_i32, %c0_i32_0 : i32, i32, i32
  }
  func.func @transform_1(%arg0: i32) -> (i32, i32) {
    %c0_i32 = arith.constant 0 : i32
    %c0_i32_0 = arith.constant 0 : i32
    %c0_i32_1 = arith.constant 0 : i32
    return %c0_i32, %c0_i32_0 : i32, i32
  }
  func.func @transform_2(%arg0: i32) -> (i32, i32) {
    %c0_i32 = arith.constant 0 : i32
    %c0_i32_0 = arith.constant 0 : i32
    %c0_i32_1 = arith.constant 0 : i32
    return %c0_i32, %c0_i32_0 : i32, i32
  }
  func.func @transform_3(%arg0: i32) -> (i32, i32, i32) {
    %c0_i32 = arith.constant 0 : i32
    %c0_i32_0 = arith.constant 0 : i32
    %c0_i32_1 = arith.constant 0 : i32
    return %arg0, %c0_i32, %c0_i32_0 : i32, i32, i32
  }
}

</mosaic_0001>

<llo_original>
// kernel: tpu_custom_call.1
$region0: #{tpu_custom_call.1}
  #allocation0 [shape = 'u32[]', space=smem, size = 0x4, offset = 0x4, fixed_abs, tag = 'smem constant byte address 0x4 - core index']
  #allocation1 [shape = 'u32[72,128]{1,0:T(1,128)}', space=vmem, size = 0x9000, scoped, tag = 'internal scratch']
  %s0 = inlined_call_operand.hbm [shape: f32[2,8,257], index: 0, kind: input, shape index: {}]
  %s1 = inlined_call_operand.vmem [shape: bf16[32,8], index: 1, kind: input, shape index: {}]
  %s2 = inlined_call_operand.vmem [shape: bf16[32,8], index: 2, kind: input, shape index: {}]
  %s3 = inlined_call_operand.hbm [shape: f32[2,32,256], index: 3, kind: output, shape index: {}]
  %s4 = sld [smem:[#allocation0]]
  $region49: #{tpu_custom_call.1} parent=0
    _
  %s6 = ssub.s32 1, %s4
  %s7 = scalar_select 0, %s6, %s4
  $region1: #{tpu_custom_call.1} parent=0
    #allocation2 [shape = 'u8[24576]{0}', space=vmem, size = 0x6000, scoped, tag = 'input window, operand 0']
    #allocation3 [shape = 's32[2]{0}', space=sflag, size = 0x8, scoped, tag = 'scoped memory for tpu_custom_call.1']
    #allocation4 [shape = 's32[2]{0}', space=sflag, size = 0x8, scoped, tag = 'scoped memory for tpu_custom_call.1']
    #allocation5 [shape = 'u8[65536]{0}', space=vmem, size = 0x10000, scoped, tag = 'output window, operand 0']
    %8 = vsyncpa [#allocation3], 0
    %s9 = scalar_lea.sflag [#allocation3], 1
    %10 = vsyncpa %s9, 0
    %11 = vsyncpa [#allocation4], 0
    %s12 = scalar_lea.sflag [#allocation4], 1
    %13 = vsyncpa %s12, 0
    loop: start=0, step=1, limit=4
    $region2: #{tpu_custom_call.1} parent=1 // loop_pre_header
      _
    $region3: #{tpu_custom_call.1} parent=1 // loop_header
      %s15 = sphi 0, %s19
      %p16 = scmp.ge.s32.totalorder %s15, 4
      %s25 = sphi 0, %s27
      %s28 = sphi 0, %s25
      %s29 = sphi 0, %s28
      %s45 = sphi 0, %s29
      %s49 = sphi 0, %s49
      %s51 = sphi 0, %s49
      %s52 = sphi 0, %s51
      %s66 = sphi 0, %s52
      %s70 = sphi 0, %s70
      %s72 = sphi 0, %s70
      %s73 = sphi 0, %s72
      %s87 = sphi 0, %s73
      %s93 = sphi 0, %s95
      %s96 = sphi 0, %s93
      %s97 = sphi 0, %s96
      %s113 = sphi 0, %s97
    $region4: #{tpu_custom_call.1} parent=1 // loop_header_branch
      %18 = sbr.rel (%p16) target = $region8
    $region5: #{tpu_custom_call.1} parent=1 // loop_body
      %s20 = ssub.s32 %s15, 1
      %s21 = ssub.s32 %s15, 2
      %s22 = sadd.s32 %s15, 1
      %s23 = ssub.s32 %s15, %s22
      %p24 = scmp.eq.s32.totalorder %s23, 0
      %s26 = sadd.s32 %s25, 1
      %s27 = scalar_select %p24, %s25, %s26
      %p30 = pneg %p24
      %p31 = scmp.eq.s32.totalorder %s15, 1
      %p32 = por %p30, %p31
      %p33 = scmp.ne.s32.totalorder %s25, %s28
      %p34 = scmp.eq.s32.totalorder %s15, 0
      %p35 = por %p33, %p34
      %p36 = scmp.ne.s32.totalorder %s25, %s28
      %p37 = scmp.eq.s32.totalorder %s20, 1
      %p38 = por %p36, %p37
      %p39 = scmp.ne.s32.totalorder %s28, %s29
      %p40 = scmp.eq.s32.totalorder %s20, 0
      %p41 = por %p39, %p40
      %p42 = scmp.ne.s32.totalorder %s28, %s29
      %p43 = scmp.eq.s32.totalorder %s21, 1
      %p44 = por %p42, %p43
      %p46 = scmp.ne.s32.totalorder %s29, %s45
      %p47 = scmp.eq.s32.totalorder %s21, 0
      %p48 = por %p46, %p47
      %s50 = sadd.s32 %s49, 1
      %p53 = scmp.eq.s32.totalorder %s15, 1
      %p54 = scmp.ne.s32.totalorder %s49, %s51
      %p55 = scmp.eq.s32.totalorder %s15, 0
      %p56 = por %p54, %p55
      %p57 = scmp.ne.s32.totalorder %s49, %s51
      %p58 = scmp.eq.s32.totalorder %s20, 1
      %p59 = por %p57, %p58
      %p60 = scmp.ne.s32.totalorder %s51, %s52
      %p61 = scmp.eq.s32.totalorder %s20, 0
      %p62 = por %p60, %p61
      %p63 = scmp.ne.s32.totalorder %s51, %s52
      %p64 = scmp.eq.s32.totalorder %s21, 1
      %p65 = por %p63, %p64
      %p67 = scmp.ne.s32.totalorder %s52, %s66
      %p68 = scmp.eq.s32.totalorder %s21, 0
      %p69 = por %p67, %p68
      %s71 = sadd.s32 %s70, 1
      %p74 = scmp.eq.s32.totalorder %s15, 1
      %p75 = scmp.ne.s32.totalorder %s70, %s72
      %p76 = scmp.eq.s32.totalorder %s15, 0
      %p77 = por %p75, %p76
      %p78 = scmp.ne.s32.totalorder %s70, %s72
      %p79 = scmp.eq.s32.totalorder %s20, 1
      %p80 = por %p78, %p79
      %p81 = scmp.ne.s32.totalorder %s72, %s73
      %p82 = scmp.eq.s32.totalorder %s20, 0
      %p83 = por %p81, %p82
      %p84 = scmp.ne.s32.totalorder %s72, %s73
      %p85 = scmp.eq.s32.totalorder %s21, 1
      %p86 = por %p84, %p85
      %p88 = scmp.ne.s32.totalorder %s73, %s87
      %p89 = scmp.eq.s32.totalorder %s21, 0
      %p90 = por %p88, %p89
      %s91 = ssub.s32 %s15, %s22
      %p92 = scmp.eq.s32.totalorder %s91, 0
      %s94 = sadd.s32 %s93, 1
      %s95 = scalar_select %p92, %s93, %s94
      %p98 = pneg %p92
      %p99 = scmp.eq.s32.totalorder %s15, 1
      %p100 = por %p98, %p99
      %p101 = scmp.ne.s32.totalorder %s93, %s96
      %p102 = scmp.eq.s32.totalorder %s15, 0
      %p103 = por %p101, %p102
      %p104 = scmp.ne.s32.totalorder %s93, %s96
      %p105 = scmp.eq.s32.totalorder %s20, 1
      %p106 = por %p104, %p105
      %p107 = scmp.ne.s32.totalorder %s96, %s97
      %p108 = scmp.eq.s32.totalorder %s20, 0
      %p109 = por %p107, %p108
      %p110 = scmp.ne.s32.totalorder %s96, %s97
      %p111 = scmp.eq.s32.totalorder %s21, 1
      %p112 = por %p110, %p111
      %p114 = scmp.ne.s32.totalorder %s97, %s113
      %p115 = scmp.eq.s32.totalorder %s21, 0
      %p116 = por %p114, %p115
      %p117 = scmp.le.s32.totalorder 1, %s15
      %p118 = scmp.lt.s32.totalorder %s15, 3
      %p119 = pnand %p117, %p118
      %p120 = pneg %p119
      // Predicated region
      $region9: #{tpu_custom_call.1} parent=5 // pred_check
        _
      $region10: #{tpu_custom_call.1} parent=5 // pred_check_branch
        %122 = sbr.rel (%p119) target = $region12
      $region11: #{tpu_custom_call.1} parent=5 // pred_region
        %s123 = ssub.s32 %s15, 1
        // Predicated region
        $region13: #{tpu_custom_call.1} parent=11 // pred_check
          %p124 = pneg %p62
        $region14: #{tpu_custom_call.1} parent=11 // pred_check_branch
          %126 = sbr.rel (%p124) target = $region16
        $region15: #{tpu_custom_call.1} parent=11 // pred_region
          _
        $region16: #{tpu_custom_call.1} parent=11 // pred_fallthru
          _
        // Predicated region
        $region17: #{tpu_custom_call.1} parent=11 // pred_check
          %p127 = pneg %p83
        $region18: #{tpu_custom_call.1} parent=11 // pred_check_branch
          %129 = sbr.rel (%p127) target = $region20
        $region19: #{tpu_custom_call.1} parent=11 // pred_region
          _
        $region20: #{tpu_custom_call.1} parent=11 // pred_fallthru
          _
      $region12: #{tpu_custom_call.1} parent=5 // pred_fallthru
        _
      %p130 = scmp.lt.s32.totalorder %s15, 2
      // Predicated region
      $region21: #{tpu_custom_call.1} parent=5 // pred_check
        %p131 = pneg %p130
      $region22: #{tpu_custom_call.1} parent=5 // pred_check_branch
        %133 = sbr.rel (%p131) target = $region24
      $region23: #{tpu_custom_call.1} parent=5 // pred_region
        // Predicated region
        $region25: #{tpu_custom_call.1} parent=23 // pred_check
          %p134 = pneg %p35
        $region26: #{tpu_custom_call.1} parent=23 // pred_check_branch
          %136 = sbr.rel (%p134) target = $region28
        $region27: #{tpu_custom_call.1} parent=23 // pred_region
          %s137 = sand.u32 %s25, 1
          %s138 = scalar_lea.sflag [#allocation3], %s137
          %s139 = sand.u32 %s25, 1
          %s140 = smul.addr %s139, 24
          %s141 = scalar_lea.vmem [#allocation2], %s140
          %143 = vsyncadd %s138, 0
          %s144 = smul.addr %s15, 3
          %s145 = smul.addr %s144, 8
          %s146 = scalar_lea.hbm %s0, %s145
          %s148 = sshll.u32 %s146, 4
          %s149 = int_to_ptr.hbm [resolvable:$true] %s148
          %s150 = sshll.u32 %s141, 4
          %s151 = int_to_ptr.vmem [resolvable:$true] %s150
          %153 = dma.hbm_to_vmem [thread:$0]  %s149, 384, %s151, %s138
        $region28: #{tpu_custom_call.1} parent=23 // pred_fallthru
          _
      $region24: #{tpu_custom_call.1} parent=5 // pred_fallthru
        _
      %p154 = scmp.le.s32.totalorder 1, %s15
      %p155 = scmp.lt.s32.totalorder %s15, 3
      %p156 = pnand %p154, %p155
      %p157 = pneg %p156
      // Predicated region
      $region29: #{tpu_custom_call.1} parent=5 // pred_check
        _
      $region30: #{tpu_custom_call.1} parent=5 // pred_check_branch
        %159 = sbr.rel (%p156) target = $region32
      $region31: #{tpu_custom_call.1} parent=5 // pred_region
        %s160 = ssub.s32 %s15, 1
        %s161 = sand.u32 %s28, 1
        %s162 = scalar_lea.sflag [#allocation3], %s161
        %s163 = sand.u32 %s28, 1
        %s164 = smul.addr %s163, 24
        %s165 = scalar_lea.vmem [#allocation2], %s164
        // Predicated region
        $region33: #{tpu_custom_call.1} parent=31 // pred_check
          %p166 = pneg %p41
        $region34: #{tpu_custom_call.1} parent=31 // pred_check_branch
          %168 = sbr.rel (%p166) target = $region36
        $region35: #{tpu_custom_call.1} parent=31 // pred_region
          %170 = dma.done %s162, 384
        $region36: #{tpu_custom_call.1} parent=31 // pred_fallthru
          _
        %s171 = sand.u32 %s28, 1
        %s172 = scalar_lea.sflag [#allocation3], %s171
        %s173 = sand.u32 %s28, 1
        %s174 = smul.addr %s173, 24
        %s175 = scalar_lea.vmem [#allocation2], %s174
        %p176 = pneg %p41
        %p177 = pneg %p38
        %p178 = pneg %p62
        %p179 = pneg %p59
        %p180 = pneg %p83
        %p181 = pneg %p80
        %p182 = pneg %p109
        %p183 = pneg %p106
        %s184 = sand.u32 %s96, 1
        %s185 = scalar_lea.sflag [#allocation4], %s184
        %s186 = sand.u32 %s96, 1
        %s187 = smul.addr %s186, 64
        %s188 = scalar_lea.vmem [#allocation5], %s187
        %v190 = vld [vmem:[%s165] sm:$0xff]
        %v191 = vld [vmem:[%s165 + $0x8] sm:$0xff]
        %v192 = vld [vmem:[%s165 + $0x10] sm:$0xff]
        %v193 = vpack.c.bf16 %v190, %v190
        %v194 = vpack.c.bf16 %v191, %v191
        %v195 = vpack.c.bf16 %v192, %v192
        %v196 = vld [vmem:[%s1] sm:$0xf]
        %v197 = vld [vmem:[%s1 + $0x4] sm:$0xf]
        %v198 = vld [vmem:[%s1 + $0x8] sm:$0xf]
        %v199 = vld [vmem:[%s1 + $0xc] sm:$0xf]
        %v200 = vld [vmem:[%s2] sm:$0xf]
        %v201 = vld [vmem:[%s2 + $0x4] sm:$0xf]
        %v202 = vld [vmem:[%s2 + $0x8] sm:$0xf]
        %v203 = vld [vmem:[%s2 + $0xc] sm:$0xf]
        %v208 = vunpack.c.l.b16 %v200
        %v209 = vunpack.c.l.b16 %v201
        %v210 = vunpack.c.l.b16 %v202
        %v211 = vunpack.c.l.b16 %v203
        %v212 = vpack.c.b16 %v209, %v208
        %v213 = vpack.c.b16 %v211, %v210
        %vm214 = vcmask 64512
        %v216 = vsel %vm214, %v212, 0
        %v219 = vsel %vm214, %v213, 0
        %vm221 = vcmask 1043456
        %v223 = vsel %vm221, %v193, 0
        %v226 = vsel %vm221, %v194, 0
        %v229 = vsel %vm221, %v195, 0
        %231 = vmatpush.bf16.msra.mxu0 0
        %232 = vmatpush.bf16.msra.mxu0 0
        %233 = vmatpush.bf16.msra.mxu0 0
        %234 = vmatpush.bf16.msra.mxu0 0
        %235 = vmatpush.bf16.msra.mxu0 0
        %236 = vmatpush.bf16.msra.mxu0 0
        %237 = vmatpush.bf16.msra.mxu0 0
        %238 = vmatpush.bf16.msra.mxu0 %v223
        %239 = vmatmul.bf16.gmra.mxu0 %v216
        %v240 = vpop.f32.mrf.mxu0
        %v241 = vadd.f32 0.0, %v240
        %v242 = vpop.f32.mrf.mxu0
        %v243 = vadd.f32 0.0, %v242
        %244 = vmatmul.bf16.gmra.mxu0 %v219
        %v245 = vpop.f32.mrf.mxu0
        %v246 = vadd.f32 0.0, %v245
        %v247 = vpop.f32.mrf.mxu0
        %v248 = vadd.f32 0.0, %v247
        %249 = vdwg.mxu0
        %250 = vmatpush.bf16.msra.mxu0 0
        %251 = vmatpush.bf16.msra.mxu0 0
        %252 = vmatpush.bf16.msra.mxu0 0
        %253 = vmatpush.bf16.msra.mxu0 0
        %254 = vmatpush.bf16.msra.mxu0 0
        %255 = vmatpush.bf16.msra.mxu0 0
        %256 = vmatpush.bf16.msra.mxu0 0
        %257 = vmatpush.bf16.msra.mxu0 %v226
        %258 = vmatmul.bf16.gmra.mxu0 %v216
        %v259 = vpop.f32.mrf.mxu0
        %v260 = vadd.f32 0.0, %v259
        %v261 = vpop.f32.mrf.mxu0
        %v262 = vadd.f32 0.0, %v261
        %263 = vmatmul.bf16.gmra.mxu0 %v219
        %v264 = vpop.f32.mrf.mxu0
        %v265 = vadd.f32 0.0, %v264
        %v266 = vpop.f32.mrf.mxu0
        %v267 = vadd.f32 0.0, %v266
        %268 = vdwg.mxu0
        %269 = vmatpush.bf16.msra.mxu0 0
        %270 = vmatpush.bf16.msra.mxu0 0
        %271 = vmatpush.bf16.msra.mxu0 0
        %272 = vmatpush.bf16.msra.mxu0 0
        %273 = vmatpush.bf16.msra.mxu0 0
        %274 = vmatpush.bf16.msra.mxu0 0
        %275 = vmatpush.bf16.msra.mxu0 0
        %276 = vmatpush.bf16.msra.mxu0 %v229
        %277 = vmatmul.bf16.gmra.mxu0 %v216
        %v278 = vpop.f32.mrf.mxu0
        %v279 = vadd.f32 0.0, %v278
        %v280 = vpop.f32.mrf.mxu0
        %v281 = vadd.f32 0.0, %v280
        %282 = vmatmul.bf16.gmra.mxu0 %v219
        %v283 = vpop.f32.mrf.mxu0
        %v284 = vadd.f32 0.0, %v283
        %v285 = vpop.f32.mrf.mxu0
        %v286 = vadd.f32 0.0, %v285
        %287 = vdwg.mxu0
        %vm288 = vcmask 1047560
        %289 = vrot.lane.b32.xlu0 %v241, 1
        %v290 = vpop.permute.xlu0 %289
        %291 = vrot.lane.b32.xlu0 %v243, 1
        %v292 = vpop.permute.xlu0 %291
        %293 = vrot.lane.b32.xlu0 %v246, 1
        %v294 = vpop.permute.xlu0 %293
        %295 = vrot.lane.b32.xlu0 %v248, 1
        %v296 = vpop.permute.xlu0 %295
        %v297 = vsel %vm288, %v290, %v279
        %v298 = vsel %vm288, %v292, %v281
        %v299 = vsel %vm288, %v294, %v284
        %v300 = vsel %vm288, %v296, %v286
        %v305 = vunpack.c.l.b16 %v196
        %v306 = vunpack.c.l.b16 %v197
        %v307 = vunpack.c.l.b16 %v198
        %v308 = vunpack.c.l.b16 %v199
        %v309 = vpack.c.b16 %v306, %v305
        %v310 = vpack.c.b16 %v308, %v307
        %323 = vrot.lane.b32.xlu0 %v241, 127
        %v324 = vpop.permute.xlu0 %323
        %325 = vrot.lane.b32.xlu0 %v260, 127
        %v326 = vpop.permute.xlu0 %325
        %327 = vrot.lane.b32.xlu0 %v297, 127
        %v328 = vpop.permute.xlu0 %327
        %329 = vrot.lane.b32.xlu0 %v243, 127
        %v330 = vpop.permute.xlu0 %329
        %331 = vrot.lane.b32.xlu0 %v262, 127
        %v332 = vpop.permute.xlu0 %331
        %333 = vrot.lane.b32.xlu0 %v298, 127
        %v334 = vpop.permute.xlu0 %333
        %335 = vrot.lane.b32.xlu0 %v246, 127
        %v336 = vpop.permute.xlu0 %335
        %337 = vrot.lane.b32.xlu0 %v265, 127
        %v338 = vpop.permute.xlu0 %337
        %339 = vrot.lane.b32.xlu0 %v299, 127
        %v340 = vpop.permute.xlu0 %339
        %341 = vrot.lane.b32.xlu0 %v248, 127
        %v342 = vpop.permute.xlu0 %341
        %343 = vrot.lane.b32.xlu0 %v267, 127
        %v344 = vpop.permute.xlu0 %343
        %345 = vrot.lane.b32.xlu0 %v300, 127
        %v346 = vpop.permute.xlu0 %345
        %vm347 = vcmask 1039360
        %v348 = vsel %vm347, %v324, %v326
        %v349 = vsel %vm347, %v326, %v328
        %v350 = vsel %vm347, %v330, %v332
        %v351 = vsel %vm347, %v332, %v334
        %v352 = vsel %vm347, %v336, %v338
        %v353 = vsel %vm347, %v338, %v340
        %v354 = vsel %vm347, %v342, %v344
        %v355 = vsel %vm347, %v344, %v346
        %v365 = vsel %vm214, %v309, 0
        %v368 = vsel %vm214, %v310, 0
        %370 = vmatpush.bf16.msra.mxu0 0
        %371 = vmatpush.bf16.msra.mxu0 0
        %372 = vmatpush.bf16.msra.mxu0 0
        %373 = vmatpush.bf16.msra.mxu0 0
        %374 = vmatpush.bf16.msra.mxu0 0
        %375 = vmatpush.bf16.msra.mxu0 0
        %376 = vmatpush.bf16.msra.mxu0 0
        %377 = vmatpush.bf16.msra.mxu0 %v223
        %378 = vmatmul.bf16.gmra.mxu0 %v365
        %v379 = vpop.f32.mrf.mxu0
        %v380 = vadd.f32 %v348, %v379
        %v381 = vpop.f32.mrf.mxu0
        %v382 = vadd.f32 %v350, %v381
        %383 = vmatmul.bf16.gmra.mxu0 %v368
        %v384 = vpop.f32.mrf.mxu0
        %v385 = vadd.f32 %v352, %v384
        %v386 = vpop.f32.mrf.mxu0
        %v387 = vadd.f32 %v354, %v386
        %388 = vdwg.mxu0
        %389 = vmatpush.bf16.msra.mxu0 0
        %390 = vmatpush.bf16.msra.mxu0 0
        %391 = vmatpush.bf16.msra.mxu0 0
        %392 = vmatpush.bf16.msra.mxu0 0
        %393 = vmatpush.bf16.msra.mxu0 0
        %394 = vmatpush.bf16.msra.mxu0 0
        %395 = vmatpush.bf16.msra.mxu0 0
        %396 = vmatpush.bf16.msra.mxu0 %v226
        %397 = vmatmul.bf16.gmra.mxu0 %v365
        %v398 = vpop.f32.mrf.mxu0
        %v399 = vadd.f32 %v349, %v398
        %v400 = vpop.f32.mrf.mxu0
        %v401 = vadd.f32 %v351, %v400
        %402 = vmatmul.bf16.gmra.mxu0 %v368
        %v403 = vpop.f32.mrf.mxu0
        %v404 = vadd.f32 %v353, %v403
        %v405 = vpop.f32.mrf.mxu0
        %v406 = vadd.f32 %v355, %v405
        %407 = vdwg.mxu0
        %v408 = vmax.f32 %v380, 0.0
        %v409 = vmax.f32 %v399, 0.0
        %v410 = vmax.f32 %v382, 0.0
        %v411 = vmax.f32 %v401, 0.0
        %v412 = vmax.f32 %v385, 0.0
        %v413 = vmax.f32 %v404, 0.0
        %v414 = vmax.f32 %v387, 0.0
        %v415 = vmax.f32 %v406, 0.0
        %416 = vst [vmem:[%s188] sm:$0xff] %v408
        %417 = vst [vmem:[%s188 + $0x8] sm:$0xff] %v409
        %418 = vst [vmem:[%s188 + $0x10] sm:$0xff] %v410
        %419 = vst [vmem:[%s188 + $0x18] sm:$0xff] %v411
        %420 = vst [vmem:[%s188 + $0x20] sm:$0xff] %v412
        %421 = vst [vmem:[%s188 + $0x28] sm:$0xff] %v413
        %422 = vst [vmem:[%s188 + $0x30] sm:$0xff] %v414
        %423 = vst [vmem:[%s188 + $0x38] sm:$0xff] %v415
        %s424 = sand.u32 %s96, 1
        %s425 = scalar_lea.sflag [#allocation4], %s424
        %s426 = sand.u32 %s96, 1
        %s427 = smul.addr %s426, 64
        %s428 = scalar_lea.vmem [#allocation5], %s427
        // Predicated region
        $region37: #{tpu_custom_call.1} parent=31 // pred_check
          %p429 = pneg %p106
        $region38: #{tpu_custom_call.1} parent=31 // pred_check_branch
          %431 = sbr.rel (%p429) target = $region40
        $region39: #{tpu_custom_call.1} parent=31 // pred_region
          %433 = vsyncadd %s425, 0
          %s434 = smul.addr %s20, 8
          %s435 = smul.addr %s434, 8
          %s436 = scalar_lea.hbm %s3, %s435
          %s437 = sshll.u32 %s428, 4
          %s438 = int_to_ptr.vmem [resolvable:$true] %s437
          %s439 = sshll.u32 %s436, 4
          %s440 = int_to_ptr.hbm [resolvable:$true] %s439
          %445 = dma.vmem_to_hbm [thread:$0]  %s438, 1024, %s440, %s425, 256, 256, 16
        $region40: #{tpu_custom_call.1} parent=31 // pred_fallthru
          _
      $region32: #{tpu_custom_call.1} parent=5 // pred_fallthru
        _
      %p446 = scmp.le.s32.totalorder 2, %s15
      // Predicated region
      $region41: #{tpu_custom_call.1} parent=5 // pred_check
        %p447 = pneg %p446
      $region42: #{tpu_custom_call.1} parent=5 // pred_check_branch
        %449 = sbr.rel (%p447) target = $region44
      $region43: #{tpu_custom_call.1} parent=5 // pred_region
        %s450 = ssub.s32 %s15, 2
        // Predicated region
        $region45: #{tpu_custom_call.1} parent=43 // pred_check
          %p451 = pneg %p112
        $region46: #{tpu_custom_call.1} parent=43 // pred_check_branch
          %453 = sbr.rel (%p451) target = $region48
        $region47: #{tpu_custom_call.1} parent=43 // pred_region
          %s454 = sand.u32 %s97, 1
          %s455 = scalar_lea.sflag [#allocation4], %s454
          %s456 = sand.u32 %s97, 1
          %s457 = smul.addr %s456, 64
          %s458 = scalar_lea.vmem [#allocation5], %s457
          %460 = dma.done %s455, 1024
        $region48: #{tpu_custom_call.1} parent=43 // pred_fallthru
          _
      $region44: #{tpu_custom_call.1} parent=5 // pred_fallthru
        _
    $region6: #{tpu_custom_call.1} parent=1 // loop_footer
      %s19 = sadd.s32 1, %s15
    $region7: #{tpu_custom_call.1} parent=1 // loop_footer_branch
      %14 = sbr.rel target = $region3
    $region8: #{tpu_custom_call.1} parent=1 // loop_exit
      _
    %461 = vsyncpa [#allocation3], 1
    %s462 = scalar_lea.sflag [#allocation3], 1
    %463 = vsyncpa %s462, 1
    %464 = vsyncpa [#allocation4], 1
    %s465 = scalar_lea.sflag [#allocation4], 1
    %466 = vsyncpa %s465, 1

</llo_original>
